<compile_context>
chip_gen: v5e
topology: v5e:2x2
jax: 0.10.0
libtpu: 0.0.40
codegen_flags: <defaults>
</compile_context>

<pallas_src>
import functools

import jax
import jax.numpy as jnp
from jax.experimental import pallas as pl
from jax.experimental.pallas import tpu as pltpu


def _convblock_kernel(patches_ref, w_ref, o_ref, acc_ref, *,
                      neg_slope, eps, inv_ptot):
    # patches_ref: (1, 1, tk, P)           bf16 (one K-chunk of one phase of one sample)
    # w_ref:       (1, Cout_t, tk)         bf16 (matching K-chunk of one Cout tile)
    # o_ref:       (1, n_phase, Cout_t, P) bf16
    # acc_ref:     (n_phase, Cout_t, P)    f32 scratch, resident over (phase, K) axes
    ph = pl.program_id(2)
    kk = pl.program_id(3)
    n_ph = pl.num_programs(2)
    n_kk = pl.num_programs(3)

    @pl.when(jnp.logical_and(ph == 0, kk == 0))
    def _init():
        acc_ref[...] = jnp.zeros_like(acc_ref)

    p = patches_ref[0, 0]                                     # (tk, P)      bf16
    w = w_ref[0]                                              # (Cout_t, tk) bf16
    acc_ref[ph] += jnp.dot(w, p, preferred_element_type=jnp.float32)   # MXU, f32 acc

    @pl.when(jnp.logical_and(ph == n_ph - 1, kk == n_kk - 1))
    def _finalize():
        acc = acc_ref[...]                                    # (n_phase, Cout_t, P) f32
        # Per-channel InstanceNorm over the full spatial extent (all phases x P
        # lanes); two-pass (mean-subtracted) variance on the resident accumulator.
        mean = jnp.sum(jnp.sum(acc, axis=2, keepdims=True),
                       axis=0, keepdims=True) * inv_ptot      # (1, Cout_t, 1)
        yc = acc - mean
        var = jnp.sum(jnp.sum(yc * yc, axis=2, keepdims=True),
                      axis=0, keepdims=True) * inv_ptot
        yn = yc * jax.lax.rsqrt(var + eps)
        act = jnp.where(yn >= 0, yn, neg_slope * yn)          # slope 0.0 == ReLU
        o_ref[0] = act.astype(o_ref.dtype)


def _im2col_cmajor(xp, k, stride):
    """xp: (N, C, Hp, Wp) already padded. Returns (N, C*k*k, Ho*Wo), Ho, Wo.

    K index ordering = ci*k*k + i*k + j (matches weight.reshape(Cout, C*k*k))."""
    N, C, Hp, Wp = xp.shape
    Ho = (Hp - k) // stride + 1
    Wo = (Wp - k) // stride + 1
    cols = []
    for i in range(k):
        for j in range(k):
            cols.append(xp[:, :, i:i + stride * (Ho - 1) + 1:stride,
                               j:j + stride * (Wo - 1) + 1:stride])  # (N,C,Ho,Wo)
    patches = jnp.stack(cols, axis=2)                # (N, C, k*k, Ho, Wo)
    patches = patches.reshape(N, C * k * k, Ho * Wo)
    return patches, Ho, Wo


def _round_up(x, m):
    return (x + m - 1) // m * m


def _vmem_limit_bytes():
    # Budget ~3/4 of the physical VMEM (~96 MiB on v5e/v6e, ~48 MiB on v7x).
    try:
        phys = pltpu.get_tpu_info().vmem_capacity_bytes
    except Exception:
        phys = 64 << 20
    return int(min(100 << 20, phys * 3 // 4))


def convblock_forward(x, weight, down):
    """x: (N, C_in, H, W) float32.

    down=True : weight (out_ch, in_ch, 4, 4) -> reflect-pad conv s2 p1, LeakyReLU(0.2)
    down=False: weight (in_ch, out_ch, 4, 4) -> conv-transpose s2 p1,   ReLU
    """
    N, C, H, W = x.shape
    xb = x.astype(jnp.bfloat16)        # cast BEFORE im2col: halves the HBM intermediate
    wb = weight.astype(jnp.bfloat16)

    if down:
        out_ch = weight.shape[0]
        xp = jnp.pad(xb, ((0, 0), (0, 0), (1, 1), (1, 1)), mode="reflect")
        patches, Ho, Wo = _im2col_cmajor(xp, 4, 2)            # (N, 16C, Ho*Wo)
        patches = patches[:, None]                            # (N, 1, K, P)
        w2 = wb.reshape(out_ch, C * 16)[None]                 # (1, Cout, K)
        n_phase = 1
        neg_slope = 0.2
    else:
        out_ch = weight.shape[1]
        Ho, Wo = 2 * H, 2 * W
        # Sub-pixel decomposition of ConvTranspose2d(4, 2, 1): output pixel
        # (2a+py, 2b+px) only uses kernel taps ky = 3-2*dy-py, kx = 3-2*dx-px on
        # input rows/cols (a-1+dy+py, b-1+dx+px).
        phases_p, phases_w = [], []
        for py in (0, 1):
            for px in (0, 1):
                pad_h = (1, 0) if py == 0 else (0, 1)
                pad_w = (1, 0) if px == 0 else (0, 1)
                xpp = jnp.pad(xb, ((0, 0), (0, 0), pad_h, pad_w))    # zero pad
                p_ph, _, _ = _im2col_cmajor(xpp, 2, 1)               # (N, 4C, H*W)
                phases_p.append(p_ph)
                ky = [3 - py, 1 - py]
                kx = [3 - px, 1 - px]
                w_ph = wb[:, :, ky, :][:, :, :, kx]                  # (C, Cout, 2, 2)
                w_ph = jnp.transpose(w_ph, (1, 0, 2, 3)).reshape(out_ch, C * 4)
                phases_w.append(w_ph)
        patches = jnp.stack(phases_p, axis=1)                        # (N, 4, 4C, HW)
        w2 = jnp.stack(phases_w, axis=0)                             # (4, Cout, 4C)
        n_phase = 4
        neg_slope = 0.0

    K = patches.shape[2]
    P = patches.shape[3]

    # K-chunk size: full K when small; otherwise multiples of 256 (256-wide MXU
    # on v6e/v7x) with the bf16 patch double-buffer capped at ~32 MiB.
    if K <= 1024:
        tk, K_pad = K, K
    else:
        tk = 1024
        while tk > 256 and 2 * tk * P * 2 > (32 << 20):
            tk //= 2
        K_pad = _round_up(K, tk)

    if K_pad != K:  # zero padding along K does not change the matmul result
        patches = jnp.pad(patches, ((0, 0), (0, 0), (0, K_pad - K), (0, 0)))
        w2 = jnp.pad(w2, ((0, 0), (0, 0), (0, K_pad - K)))

    # Cout padded to a multiple of 16 (bf16 sublane packing) and tiled in chunks
    # of <=256 channels. Padded channels are all-zero -> normalize to 0 and are
    # sliced off; InstanceNorm stats are per-channel, so Cout tiling is exact.
    Cout_pad = _round_up(out_ch, 16)
    if Cout_pad > 256:
        Cout_t = 256
        Cout_pad = _round_up(Cout_pad, Cout_t)
    else:
        Cout_t = Cout_pad
    n_ct = Cout_pad // Cout_t
    if Cout_pad != out_ch:
        w2 = jnp.pad(w2, ((0, 0), (0, Cout_pad - out_ch), (0, 0)))

    k_tiles = K_pad // tk

    out = pl.pallas_call(
        functools.partial(_convblock_kernel, neg_slope=neg_slope, eps=1e-5,
                          inv_ptot=1.0 / float(n_phase * P)),
        out_shape=jax.ShapeDtypeStruct((N, n_phase, Cout_pad, P), jnp.bfloat16),
        grid_spec=pltpu.PrefetchScalarGridSpec(
            num_scalar_prefetch=0,
            grid=(N, n_ct, n_phase, k_tiles),
            in_specs=[
                pl.BlockSpec((1, 1, tk, P),
                             lambda n, c, ph, kk: (n, ph, kk, 0)),
                pl.BlockSpec((1, Cout_t, tk),
                             lambda n, c, ph, kk: (ph, c, kk)),
            ],
            out_specs=pl.BlockSpec((1, n_phase, Cout_t, P),
                                   lambda n, c, ph, kk: (n, 0, c, 0)),
            scratch_shapes=[pltpu.VMEM((n_phase, Cout_t, P), jnp.float32)],
        ),
        compiler_params=pltpu.CompilerParams(
            dimension_semantics=("parallel", "parallel", "arbitrary", "arbitrary"),
            vmem_limit_bytes=_vmem_limit_bytes(),
        ),
    )(patches, w2)

    out = out[:, :, :out_ch]                              # (N, n_phase, Cout, P) bf16
    if down:
        y = out[:, 0].reshape(N, out_ch, Ho, Wo)
    else:
        # interleave the 4 phases back into (N, Cout, 2H, 2W) — done in bf16
        y = out.reshape(N, 2, 2, out_ch, H, W)            # (N, py, px, C, a, b)
        y = jnp.transpose(y, (0, 3, 4, 1, 5, 2))          # (N, C, a, py, b, px)
        y = y.reshape(N, out_ch, 2 * H, 2 * W)
    return y.astype(x.dtype)


def _ref_convblock(x, weight, down):
    """Pure-JAX f32 reference with identical semantics (for a sanity check)."""
    if down:
        xp = jnp.pad(x, ((0, 0), (0, 0), (1, 1), (1, 1)), mode="reflect")
        y = jax.lax.conv_general_dilated(
            xp, weight, (2, 2), "VALID",
            dimension_numbers=("NCHW", "OIHW", "NCHW"))
        slope = 0.2
    else:
        w = jnp.transpose(weight, (1, 0, 2, 3))[:, :, ::-1, ::-1]
        y = jax.lax.conv_general_dilated(
            x, w, (1, 1), [(2, 2), (2, 2)], lhs_dilation=(2, 2),
            dimension_numbers=("NCHW", "OIHW", "NCHW"))
        slope = 0.0
    mean = jnp.mean(y, axis=(2, 3), keepdims=True)
    var = jnp.mean((y - mean) ** 2, axis=(2, 3), keepdims=True)
    yn = (y - mean) * jax.lax.rsqrt(var + 1e-5)
    return jnp.where(yn >= 0, yn, slope * yn)


if __name__ == "__main__":
    key = jax.random.PRNGKey(0)
    k_x, k_wd, k_wu = jax.random.split(key, 3)

    N, C_in, H, W = 2, 4, 16, 16
    out_ch = 8

    x = jax.random.normal(k_x, (N, C_in, H, W), dtype=jnp.float32)
    w_down = jax.random.normal(k_wd, (out_ch, C_in, 4, 4), dtype=jnp.float32) * 0.1
    w_up = jax.random.normal(k_wu, (C_in, out_ch, 4, 4), dtype=jnp.float32) * 0.1

    y_down = convblock_forward(x, w_down, down=True)   # (2, 8, 8, 8)
    y_up = convblock_forward(x, w_up, down=False)      # (2, 8, 32, 32)
    jax.block_until_ready(y_down)
    jax.block_until_ready(y_up)

    assert y_down.shape == (N, out_ch, H // 2, W // 2), y_down.shape
    assert y_up.shape == (N, out_ch, H * 2, W * 2), y_up.shape
    assert bool(jnp.all(jnp.isfinite(y_down))) and bool(jnp.all(jnp.isfinite(y_up)))

    # Numerical sanity check vs f32 reference (kernel uses bf16 MXU operands + bf16 out).
    ref_d = _ref_convblock(x, w_down, down=True)
    ref_u = _ref_convblock(x, w_up, down=False)
    err_d = float(jnp.max(jnp.abs(y_down - ref_d)))
    err_u = float(jnp.max(jnp.abs(y_up - ref_u)))
    assert err_d < 0.15 and err_u < 0.15, (err_d, err_u)

    print("KERNEL_OK")
</pallas_src>

<mosaic_0001>
module attributes {stable_mosaic.version = 11 : i64} {
  func.func @_convblock_kernel(%arg0: i32, %arg1: i32, %arg2: i32, %arg3: i32, %arg4: memref<1x1x64x64xbf16, #tpu.memory_space<vmem>>, %arg5: memref<1x16x64xbf16, #tpu.memory_space<vmem>>, %arg6: memref<1x1x16x64xbf16, #tpu.memory_space<vmem>>, %arg7: memref<1x16x64xf32, #tpu.memory_space<vmem>>) attributes {dimension_semantics = [#tpu.dimension_semantics<parallel>, #tpu.dimension_semantics<parallel>, #tpu.dimension_semantics<arbitrary>, #tpu.dimension_semantics<arbitrary>], iteration_bounds = array<i64: 2, 1, 1, 1>, scalar_prefetch = 0 : i64, scratch_operands = 1 : i64, tpu.core_type = #tpu.core_type<tc>, window_params = [{transform_indices = @transform_0, window_bounds = array<i64: 1, 1, 64, 64>}, {transform_indices = @transform_1, window_bounds = array<i64: 1, 16, 64>}, {transform_indices = @transform_2, window_bounds = array<i64: 1, 1, 16, 64>}]} {
    %c0_i32 = arith.constant 0 : i32
    %0 = arith.cmpi eq, %arg2, %c0_i32 : i32
    %c0_i32_0 = arith.constant 0 : i32
    %1 = arith.cmpi eq, %arg3, %c0_i32_0 : i32
    %2 = arith.andi %0, %1 : i1
    %3 = arith.extui %2 : i1 to i32
    %c0_i32_1 = arith.constant 0 : i32
    %4 = arith.cmpi ne, %3, %c0_i32_1 : i32
    scf.if %4 {
      %cst_15 = arith.constant 0.000000e+00 : f32
      %23 = vector.broadcast %cst_15 : f32 to vector<1x16x64xf32>
      %c0_16 = arith.constant 0 : index
      %c0_17 = arith.constant 0 : index
      %c0_18 = arith.constant 0 : index
      %24 = vector.load %arg7[%c0_16, %c0_17, %c0_18] : memref<1x16x64xf32, #tpu.memory_space<vmem>>, vector<1x16x64xf32>
      tpu.vector_store %arg7[%c0_16, %c0_17, %c0_18], %23 {strides = array<i32>} : memref<1x16x64xf32, #tpu.memory_space<vmem>>, vector<1x16x64xf32>,
    } else {
    }
    %c0 = arith.constant 0 : index
    %c0_2 = arith.constant 0 : index
    %c0_3 = arith.constant 0 : index
    %c0_4 = arith.constant 0 : index
    %5 = vector.load %arg4[%c0, %c0_2, %c0_3, %c0_4] : memref<1x1x64x64xbf16, #tpu.memory_space<vmem>>, vector<1x1x64x64xbf16>
    %6 = vector.shape_cast %5 : vector<1x1x64x64xbf16> to vector<64x64xbf16>
    %c0_5 = arith.constant 0 : index
    %c0_6 = arith.constant 0 : index
    %c0_7 = arith.constant 0 : index
    %7 = vector.load %arg5[%c0_5, %c0_6, %c0_7] : memref<1x16x64xbf16, #tpu.memory_space<vmem>>, vector<1x16x64xbf16>
    %8 = vector.shape_cast %7 : vector<1x16x64xbf16> to vector<16x64xbf16>
    %9 = arith.index_cast %arg2 : i32 to index
    %c0_8 = arith.constant 0 : index
    %c0_9 = arith.constant 0 : index
    %10 = vector.load %arg7[%9, %c0_8, %c0_9] : memref<1x16x64xf32, #tpu.memory_space<vmem>>, vector<1x16x64xf32>
    %11 = vector.shape_cast %10 : vector<1x16x64xf32> to vector<16x64xf32>
    %cst = arith.constant dense<0.000000e+00> : vector<16x64xf32>
    %12 = tpu.matmul %8, %6, %cst {dimension_numbers = #tpu.dot_dimension_numbers<[1], [0], [0], [1], [0, 0, 1, 1], [], []>} : vector<16x64xbf16>, vector<64x64xbf16>, vector<16x64xf32> -> vector<16x64xf32>
    %13 = arith.addf %11, %12 : vector<16x64xf32>
    %14 = arith.index_cast %arg2 : i32 to index
    %c0_10 = arith.constant 0 : index
    %c0_11 = arith.constant 0 : index
    %15 = vector.load %arg7[%14, %c0_10, %c0_11] : memref<1x16x64xf32, #tpu.memory_space<vmem>>, vector<1x16x64xf32>
    %16 = vector.shape_cast %15 : vector<1x16x64xf32> to vector<16x64xf32>
    %17 = vector.shape_cast %13 : vector<16x64xf32> to vector<1x16x64xf32>
    tpu.vector_store %arg7[%14, %c0_10, %c0_11], %17 {strides = array<i32>} : memref<1x16x64xf32, #tpu.memory_space<vmem>>, vector<1x16x64xf32>,
    %c0_i32_12 = arith.constant 0 : i32
    %18 = arith.cmpi eq, %arg2, %c0_i32_12 : i32
    %c0_i32_13 = arith.constant 0 : i32
    %19 = arith.cmpi eq, %arg3, %c0_i32_13 : i32
    %20 = arith.andi %18, %19 : i1
    %21 = arith.extui %20 : i1 to i32
    %c0_i32_14 = arith.constant 0 : i32
    %22 = arith.cmpi ne, %21, %c0_i32_14 : i32
    scf.if %22 {
      %c0_15 = arith.constant 0 : index
      %c0_16 = arith.constant 0 : index
      %c0_17 = arith.constant 0 : index
      %23 = vector.load %arg7[%c0_15, %c0_16, %c0_17] : memref<1x16x64xf32, #tpu.memory_space<vmem>>, vector<1x16x64xf32>
      %cst_18 = arith.constant dense<0.000000e+00> : vector<1x16xf32>
      %24 = vector.multi_reduction <add>, %23, %cst_18 [2] : vector<1x16x64xf32> to vector<1x16xf32>
      %25 = vector.shape_cast %24 : vector<1x16xf32> to vector<1x16x1xf32>
      %cst_19 = arith.constant dense<0.000000e+00> : vector<16x1xf32>
      %26 = vector.multi_reduction <add>, %25, %cst_19 [0] : vector<1x16x1xf32> to vector<16x1xf32>
      %27 = vector.shape_cast %26 : vector<16x1xf32> to vector<1x16x1xf32>
      %cst_20 = arith.constant 1.562500e-02 : f32
      %28 = vector.broadcast %cst_20 : f32 to vector<1x16x1xf32>
      %29 = arith.mulf %27, %28 : vector<1x16x1xf32>
      %30 = vector.broadcast %29 : vector<1x16x1xf32> to vector<1x16x64xf32>
      %31 = arith.subf %23, %30 : vector<1x16x64xf32>
      %32 = arith.mulf %31, %31 : vector<1x16x64xf32>
      %cst_21 = arith.constant dense<0.000000e+00> : vector<1x16xf32>
      %33 = vector.multi_reduction <add>, %32, %cst_21 [2] : vector<1x16x64xf32> to vector<1x16xf32>
      %34 = vector.shape_cast %33 : vector<1x16xf32> to vector<1x16x1xf32>
      %cst_22 = arith.constant dense<0.000000e+00> : vector<16x1xf32>
      %35 = vector.multi_reduction <add>, %34, %cst_22 [0] : vector<1x16x1xf32> to vector<16x1xf32>
      %36 = vector.shape_cast %35 : vector<16x1xf32> to vector<1x16x1xf32>
      %cst_23 = arith.constant 1.562500e-02 : f32
      %37 = vector.broadcast %cst_23 : f32 to vector<1x16x1xf32>
      %38 = arith.mulf %36, %37 : vector<1x16x1xf32>
      %cst_24 = arith.constant 9.99999974E-6 : f32
      %39 = vector.broadcast %cst_24 : f32 to vector<1x16x1xf32>
      %40 = arith.addf %38, %39 : vector<1x16x1xf32>
      %41 = math.rsqrt %40 : vector<1x16x1xf32>
      %42 = vector.broadcast %41 : vector<1x16x1xf32> to vector<1x16x64xf32>
      %43 = arith.mulf %31, %42 : vector<1x16x64xf32>
      %cst_25 = arith.constant 0.000000e+00 : f32
      %44 = vector.broadcast %cst_25 : f32 to vector<1x16x64xf32>
      %45 = arith.cmpf oge, %43, %44 : vector<1x16x64xf32>
      %cst_26 = arith.constant 2.000000e-01 : f32
      %46 = vector.broadcast %cst_26 : f32 to vector<1x16x64xf32>
      %47 = arith.mulf %46, %43 : vector<1x16x64xf32>
      %48 = arith.select %45, %43, %47 : vector<1x16x64xi1>, vector<1x16x64xf32>
      %49 = arith.truncf %48 : vector<1x16x64xf32> to vector<1x16x64xbf16>
      %c0_27 = arith.constant 0 : index
      %c0_28 = arith.constant 0 : index
      %c0_29 = arith.constant 0 : index
      %c0_30 = arith.constant 0 : index
      %50 = vector.load %arg6[%c0_27, %c0_28, %c0_29, %c0_30] : memref<1x1x16x64xbf16, #tpu.memory_space<vmem>>, vector<1x1x16x64xbf16>
      %51 = vector.shape_cast %50 : vector<1x1x16x64xbf16> to vector<1x16x64xbf16>
      %52 = vector.shape_cast %49 : vector<1x16x64xbf16> to vector<1x1x16x64xbf16>
      tpu.vector_store %arg6[%c0_27, %c0_28, %c0_29, %c0_30], %52 {strides = array<i32>} : memref<1x1x16x64xbf16, #tpu.memory_space<vmem>>, vector<1x1x16x64xbf16>,
    } else {
    }
    return
  }
  func.func @transform_0(%arg0: i32, %arg1: i32, %arg2: i32, %arg3: i32) -> (i32, i32, i32, i32) {
    %c0_i32 = arith.constant 0 : i32
    %c0_i32_0 = arith.constant 0 : i32
    return %arg0, %arg2, %arg3, %c0_i32 : i32, i32, i32, i32
  }
  func.func @transform_1(%arg0: i32, %arg1: i32, %arg2: i32, %arg3: i32) -> (i32, i32, i32) {
    %c0_i32 = arith.constant 0 : i32
    return %arg2, %arg1, %arg3 : i32, i32, i32
  }
  func.func @transform_2(%arg0: i32, %arg1: i32, %arg2: i32, %arg3: i32) -> (i32, i32, i32, i32) {
    %c0_i32 = arith.constant 0 : i32
    %c0_i32_0 = arith.constant 0 : i32
    %c0_i32_1 = arith.constant 0 : i32
    return %arg0, %c0_i32, %arg1, %c0_i32_0 : i32, i32, i32, i32
  }
}

</mosaic_0001>

<llo_original>
// kernel: tpu_custom_call.1
$region0: #{tpu_custom_call.1}
  #allocation0 [shape = 'u32[]', space=smem, size = 0x4, offset = 0x4, fixed_abs, tag = 'smem constant byte address 0x4 - core index']
  #allocation1 [shape = 'u32[72,128]{1,0:T(1,128)}', space=vmem, size = 0x9000, scoped, tag = 'internal scratch']
  #allocation2 [shape = 'f32[1,16,64]{2,1,0:T(8,128)}', space=vmem, size = 0x2000, scoped, tag = 'scratch operand']
  %s0 = inlined_call_operand.hbm [shape: bf16[2,1,64,64], index: 0, kind: input, shape index: {}]
  %s1 = inlined_call_operand.hbm [shape: bf16[1,16,64], index: 1, kind: input, shape index: {}]
  %s2 = inlined_call_operand.hbm [shape: bf16[2,1,16,64], index: 2, kind: output, shape index: {}]
  %s3 = sld [smem:[#allocation0]]
  $region57: #{tpu_custom_call.1} parent=0
    _
  %s5 = ssub.s32 1, %s3
  %s6 = scalar_select 0, %s5, %s3
  $region1: #{tpu_custom_call.1} parent=0
    #allocation3 [shape = 'u8[32768]{0}', space=vmem, size = 0x8000, scoped, tag = 'input window, operand 0']
    #allocation4 [shape = 's32[2]{0}', space=sflag, size = 0x8, scoped, tag = 'scoped memory for tpu_custom_call.1']
    #allocation5 [shape = 's32[2]{0}', space=sflag, size = 0x8, scoped, tag = 'scoped memory for tpu_custom_call.1']
    #allocation6 [shape = 'u8[4096]{0}', space=vmem, size = 0x1000, scoped, tag = 'input window, operand 1, single buffered']
    #allocation7 [shape = 's32[1]{0}', space=sflag, size = 0x4, scoped, tag = 'scoped memory for tpu_custom_call.1']
    #allocation8 [shape = 'u8[8192]{0}', space=vmem, size = 0x2000, scoped, tag = 'output window, operand 0']
    %7 = vsyncpa [#allocation4], 0
    %s8 = scalar_lea.sflag [#allocation4], 1
    %9 = vsyncpa %s8, 0
    %10 = vsyncpa [#allocation7], 0
    %11 = vsyncpa [#allocation5], 0
    %s12 = scalar_lea.sflag [#allocation5], 1
    %13 = vsyncpa %s12, 0
    loop: start=0, step=1, limit=4
    $region2: #{tpu_custom_call.1} parent=1 // loop_pre_header
      _
    $region3: #{tpu_custom_call.1} parent=1 // loop_header
      %s15 = sphi 0, %s19
      %p16 = scmp.ge.s32.totalorder %s15, 4
      %s22 = sphi 0, %s48
      %s23 = sphi 0, %s44
      %s24 = sphi 0, %s40
      %s25 = sphi 0, %s36
      %s26 = sphi 0, %s22
      %s27 = sphi 0, %s23
      %s28 = sphi 0, %s24
      %s29 = sphi 0, %s25
      %s30 = sphi 0, %s26
      %s31 = sphi 0, %s27
      %s32 = sphi 0, %s28
      %s33 = sphi 0, %s29
      %s55 = sphi 0, %s57
      %s58 = sphi 0, %s55
      %s59 = sphi 0, %s58
      %s75 = sphi 0, %s59
      %s85 = sphi 0, %s87
      %s88 = sphi 0, %s85
      %s89 = sphi 0, %s88
      %s105 = sphi 0, %s89
      %s113 = sphi 0, %s115
      %s116 = sphi 0, %s113
      %s117 = sphi 0, %s116
      %s133 = sphi 0, %s117
    $region4: #{tpu_custom_call.1} parent=1 // loop_header_branch
      %18 = sbr.rel (%p16) target = $region8
    $region5: #{tpu_custom_call.1} parent=1 // loop_body
      %s20 = ssub.s32 %s15, 1
      %s21 = ssub.s32 %s15, 2
      %s34 = sadd.s32 1, %s25
      %p35 = scmp.ge.s32.totalorder %s34, 1
      %s36 = scalar_select %p35, 0, %s34
      %s37 = sadd.s32 1, %s24
      %s38 = scalar_select %p35, %s37, %s24
      %p39 = scmp.ge.s32.totalorder %s38, 1
      %s40 = scalar_select %p39, 0, %s38
      %s41 = sadd.s32 1, %s23
      %s42 = scalar_select %p39, %s41, %s23
      %p43 = scmp.ge.s32.totalorder %s42, 1
      %s44 = scalar_select %p43, 0, %s42
      %s45 = sadd.s32 1, %s22
      %s46 = scalar_select %p43, %s45, %s22
      %p47 = scmp.ge.s32.totalorder %s46, 2
      %s48 = scalar_select %p47, 0, %s46
      %s49 = ssub.s32 %s22, %s48
      %s50 = ssub.s32 %s24, %s40
      %s51 = sor.u32 %s49, %s50
      %s52 = ssub.s32 %s25, %s36
      %s53 = sor.u32 %s51, %s52
      %p54 = scmp.eq.s32.totalorder %s53, 0
      %s56 = sadd.s32 %s55, 1
      %s57 = scalar_select %p54, %s55, %s56
      %p60 = pneg %p54
      %p61 = scmp.eq.s32.totalorder %s15, 1
      %p62 = por %p60, %p61
      %p63 = scmp.ne.s32.totalorder %s55, %s58
      %p64 = scmp.eq.s32.totalorder %s15, 0
      %p65 = por %p63, %p64
      %p66 = scmp.ne.s32.totalorder %s55, %s58
      %p67 = scmp.eq.s32.totalorder %s20, 1
      %p68 = por %p66, %p67
      %p69 = scmp.ne.s32.totalorder %s58, %s59
      %p70 = scmp.eq.s32.totalorder %s20, 0
      %p71 = por %p69, %p70
      %p72 = scmp.ne.s32.totalorder %s58, %s59
      %p73 = scmp.eq.s32.totalorder %s21, 1
      %p74 = por %p72, %p73
      %p76 = scmp.ne.s32.totalorder %s59, %s75
      %p77 = scmp.eq.s32.totalorder %s21, 0
      %p78 = por %p76, %p77
      %s79 = ssub.s32 %s24, %s40
      %s80 = ssub.s32 %s23, %s44
      %s81 = sor.u32 %s79, %s80
      %s82 = ssub.s32 %s25, %s36
      %s83 = sor.u32 %s81, %s82
      %p84 = scmp.eq.s32.totalorder %s83, 0
      %s86 = sadd.s32 %s85, 1
      %s87 = scalar_select %p84, %s85, %s86
      %p90 = pneg %p84
      %p91 = scmp.eq.s32.totalorder %s15, 1
      %p92 = por %p90, %p91
      %p93 = scmp.ne.s32.totalorder %s85, %s88
      %p94 = scmp.eq.s32.totalorder %s15, 0
      %p95 = por %p93, %p94
      %p96 = scmp.ne.s32.totalorder %s85, %s88
      %p97 = scmp.eq.s32.totalorder %s20, 1
      %p98 = por %p96, %p97
      %p99 = scmp.ne.s32.totalorder %s88, %s89
      %p100 = scmp.eq.s32.totalorder %s20, 0
      %p101 = por %p99, %p100
      %p102 = scmp.ne.s32.totalorder %s88, %s89
      %p103 = scmp.eq.s32.totalorder %s21, 1
      %p104 = por %p102, %p103
      %p106 = scmp.ne.s32.totalorder %s89, %s105
      %p107 = scmp.eq.s32.totalorder %s21, 0
      %p108 = por %p106, %p107
      %s109 = ssub.s32 %s22, %s48
      %s110 = ssub.s32 %s23, %s44
      %s111 = sor.u32 %s109, %s110
      %p112 = scmp.eq.s32.totalorder %s111, 0
      %s114 = sadd.s32 %s113, 1
      %s115 = scalar_select %p112, %s113, %s114
      %p118 = pneg %p112
      %p119 = scmp.eq.s32.totalorder %s15, 1
      %p120 = por %p118, %p119
      %p121 = scmp.ne.s32.totalorder %s113, %s116
      %p122 = scmp.eq.s32.totalorder %s15, 0
      %p123 = por %p121, %p122
      %p124 = scmp.ne.s32.totalorder %s113, %s116
      %p125 = scmp.eq.s32.totalorder %s20, 1
      %p126 = por %p124, %p125
      %p127 = scmp.ne.s32.totalorder %s116, %s117
      %p128 = scmp.eq.s32.totalorder %s20, 0
      %p129 = por %p127, %p128
      %p130 = scmp.ne.s32.totalorder %s116, %s117
      %p131 = scmp.eq.s32.totalorder %s21, 1
      %p132 = por %p130, %p131
      %p134 = scmp.ne.s32.totalorder %s117, %s133
      %p135 = scmp.eq.s32.totalorder %s21, 0
      %p136 = por %p134, %p135
      %p137 = scmp.le.s32.totalorder 1, %s15
      %p138 = scmp.lt.s32.totalorder %s15, 3
      %p139 = pnand %p137, %p138
      %p140 = pneg %p139
      // Predicated region
      $region9: #{tpu_custom_call.1} parent=5 // pred_check
        _
      $region10: #{tpu_custom_call.1} parent=5 // pred_check_branch
        %142 = sbr.rel (%p139) target = $region12
      $region11: #{tpu_custom_call.1} parent=5 // pred_region
        %s143 = ssub.s32 %s15, 1
        // Predicated region
        $region13: #{tpu_custom_call.1} parent=11 // pred_check
          %p144 = pneg %p101
        $region14: #{tpu_custom_call.1} parent=11 // pred_check_branch
          %146 = sbr.rel (%p144) target = $region16
        $region15: #{tpu_custom_call.1} parent=11 // pred_region
          %s147 = smul.u32 2, %s27
          %149 = vsyncadd [#allocation7], 0
          %s150 = sadd.s32 %s29, %s147
          %s151 = smul.addr %s28, 2
          %s152 = sadd.s32 %s150, %s151
          %s153 = smul.addr %s152, 4
          %s154 = scalar_lea.hbm %s1, %s153
          %s155 = sshll.u32 %s154, 4
          %s156 = int_to_ptr.hbm [resolvable:$true] %s155
          %s157 = sshll.u32 [#allocation6], 4
          %s158 = int_to_ptr.vmem [resolvable:$true] %s157
          %163 = dma.hbm_to_vmem [thread:$0]  %s156, 128, %s158, [#allocation7], 64, 64, 4
        $region16: #{tpu_custom_call.1} parent=11 // pred_fallthru
          _
      $region12: #{tpu_custom_call.1} parent=5 // pred_fallthru
        _
      %p164 = scmp.lt.s32.totalorder %s15, 2
      // Predicated region
      $region17: #{tpu_custom_call.1} parent=5 // pred_check
        %p165 = pneg %p164
      $region18: #{tpu_custom_call.1} parent=5 // pred_check_branch
        %167 = sbr.rel (%p165) target = $region20
      $region19: #{tpu_custom_call.1} parent=5 // pred_region
        // Predicated region
        $region21: #{tpu_custom_call.1} parent=19 // pred_check
          %p168 = pneg %p65
        $region22: #{tpu_custom_call.1} parent=19 // pred_check_branch
          %170 = sbr.rel (%p168) target = $region24
        $region23: #{tpu_custom_call.1} parent=19 // pred_region
          %s171 = sand.u32 %s55, 1
          %s172 = scalar_lea.sflag [#allocation4], %s171
          %s173 = sand.u32 %s55, 1
          %s174 = smul.addr %s173, 32
          %s175 = scalar_lea.vmem [#allocation3], %s174
          %s176 = smul.u32 8, %s25
          %178 = vsyncadd %s172, 0
          %s179 = smul.addr %s24, 8
          %s180 = sadd.s32 %s176, %s179
          %s181 = smul.addr %s22, 8
          %s182 = sadd.s32 %s180, %s181
          %s183 = smul.addr %s182, 4
          %s184 = scalar_lea.hbm %s0, %s183
          %s185 = sshll.u32 %s184, 4
          %s186 = int_to_ptr.hbm [resolvable:$true] %s185
          %s187 = sshll.u32 %s175, 4
          %s188 = int_to_ptr.vmem [resolvable:$true] %s187
          %193 = dma.hbm_to_vmem [thread:$0]  %s186, 512, %s188, %s172, 64, 64, 4
        $region24: #{tpu_custom_call.1} parent=19 // pred_fallthru
          _
      $region20: #{tpu_custom_call.1} parent=5 // pred_fallthru
        _
      %p194 = scmp.le.s32.totalorder 1, %s15
      %p195 = scmp.lt.s32.totalorder %s15, 3
      %p196 = pnand %p194, %p195
      %p197 = pneg %p196
      // Predicated region
      $region25: #{tpu_custom_call.1} parent=5 // pred_check
        _
      $region26: #{tpu_custom_call.1} parent=5 // pred_check_branch
        %199 = sbr.rel (%p196) target = $region28
      $region27: #{tpu_custom_call.1} parent=5 // pred_region
        %s200 = ssub.s32 %s15, 1
        %s201 = sand.u32 %s58, 1
        %s202 = scalar_lea.sflag [#allocation4], %s201
        %s203 = sand.u32 %s58, 1
        %s204 = smul.addr %s203, 32
        %s205 = scalar_lea.vmem [#allocation3], %s204
        // Predicated region
        $region29: #{tpu_custom_call.1} parent=27 // pred_check
          %p206 = pneg %p71
        $region30: #{tpu_custom_call.1} parent=27 // pred_check_branch
          %208 = sbr.rel (%p206) target = $region32
        $region31: #{tpu_custom_call.1} parent=27 // pred_region
          %210 = dma.done %s202, 512
        $region32: #{tpu_custom_call.1} parent=27 // pred_fallthru
          _
        // Predicated region
        $region33: #{tpu_custom_call.1} parent=27 // pred_check
          %p211 = pneg %p101
        $region34: #{tpu_custom_call.1} parent=27 // pred_check_branch
          %213 = sbr.rel (%p211) target = $region36
        $region35: #{tpu_custom_call.1} parent=27 // pred_region
          %215 = dma.done [#allocation7], 128
        $region36: #{tpu_custom_call.1} parent=27 // pred_fallthru
          _
        %s216 = sand.u32 %s58, 1
        %s217 = scalar_lea.sflag [#allocation4], %s216
        %s218 = sand.u32 %s58, 1
        %s219 = smul.addr %s218, 32
        %s220 = scalar_lea.vmem [#allocation3], %s219
        %p221 = pneg %p71
        %p222 = pneg %p68
        %p223 = pneg %p101
        %p224 = pneg %p98
        %p225 = pneg %p129
        %p226 = pneg %p126
        %s227 = sand.u32 %s116, 1
        %s228 = scalar_lea.sflag [#allocation5], %s227
        %s229 = sand.u32 %s116, 1
        %s230 = smul.addr %s229, 8
        %s231 = scalar_lea.vmem [#allocation8], %s230
        %s232 = smul.u32 8, %s29
        %s233 = smul.u32 2, %s27
        %s234 = smul.u32 2, %s27
        %p236 = scmp.eq.s32.totalorder %s28, 0
        %p237 = scmp.eq.s32.totalorder %s29, 0
        %p238 = pnand %p236, %p237
        %p239 = pneg %p238
        // Predicated region
        $region37: #{tpu_custom_call.1} parent=27 // pred_check
          _
        $region38: #{tpu_custom_call.1} parent=27 // pred_check_branch
          %241 = sbr.rel (%p238) target = $region40
        $region39: #{tpu_custom_call.1} parent=27 // pred_region
          %vm242 = vcmask 523264
          %243 = vst.msk [vmem:[#allocation2] sm:$0xff] %vm242, 0.0
          %244 = vst.msk [vmem:[#allocation2 + $0x8] sm:$0xff] %vm242, 0.0
        $region40: #{tpu_custom_call.1} parent=27 // pred_fallthru
          _
        %v245 = vld [vmem:[%s205] sm:$0xf]
        %v246 = vld [vmem:[%s205 + $0x4] sm:$0xf]
        %v247 = vld [vmem:[%s205 + $0x8] sm:$0xf]
        %v248 = vld [vmem:[%s205 + $0xc] sm:$0xf]
        %v249 = vld [vmem:[%s205 + $0x10] sm:$0xf]
        %v250 = vld [vmem:[%s205 + $0x14] sm:$0xf]
        %v251 = vld [vmem:[%s205 + $0x18] sm:$0xf]
        %v252 = vld [vmem:[%s205 + $0x1c] sm:$0xf]
        %v253 = vld [vmem:[#allocation6] sm:$0xf]
        %v254 = vld [vmem:[#allocation6 + $0x4] sm:$0xf]
        %s255 = smul.u32 %s28, 16
        %s256 = scalar_lea.vmem [#allocation2], %s255
        %v257 = vld [vmem:[%s256] sm:$0xff]
        %v258 = vld [vmem:[%s256 + $0x8] sm:$0xff]
        %v261 = vunpack.c.l.b16 %v253
        %v262 = vunpack.c.l.b16 %v254
        %v263 = vpack.c.b16 %v262, %v261
        %v272 = vunpack.c.l.b16 %v245
        %v273 = vunpack.c.l.b16 %v246
        %v274 = vunpack.c.l.b16 %v247
        %v275 = vunpack.c.l.b16 %v248
        %v276 = vunpack.c.l.b16 %v249
        %v277 = vunpack.c.l.b16 %v250
        %v278 = vunpack.c.l.b16 %v251
        %v279 = vunpack.c.l.b16 %v252
        %v280 = vpack.c.b16 %v273, %v272
        %v281 = vpack.c.b16 %v275, %v274
        %v282 = vpack.c.b16 %v277, %v276
        %v283 = vpack.c.b16 %v279, %v278
        %vm288 = vcmask 523264
        %v290 = vsel %vm288, %v263, 0
        %292 = vmatpush.bf16.msra.mxu0 0
        %293 = vmatpush.bf16.msra.mxu0 0
        %294 = vmatpush.bf16.msra.mxu0 0
        %295 = vmatpush.bf16.msra.mxu0 0
        %296 = vmatpush.bf16.msra.mxu0 %v283
        %297 = vmatpush.bf16.msra.mxu0 %v282
        %298 = vmatpush.bf16.msra.mxu0 %v281
        %299 = vmatpush.bf16.msra.mxu0 %v280
        %300 = vmatmul.bf16.gmra.mxu0 %v290
        %v301 = vpop.f32.mrf.mxu0
        %v302 = vadd.f32 0.0, %v301
        %v303 = vpop.f32.mrf.mxu0
        %v304 = vadd.f32 0.0, %v303
        %305 = vdwg.mxu0
        %v306 = vadd.f32 %v257, %v302
        %v307 = vadd.f32 %v258, %v304
        %308 = vst.msk [vmem:[%s256] sm:$0xff] %vm288, %v306
        %309 = vst.msk [vmem:[%s256 + $0x8] sm:$0xff] %vm288, %v307
        // Predicated region
        $region41: #{tpu_custom_call.1} parent=27 // pred_check
          _
        $region42: #{tpu_custom_call.1} parent=27 // pred_check_branch
          %311 = sbr.rel (%p238) target = $region44
        $region43: #{tpu_custom_call.1} parent=27 // pred_region
          %v312 = vld [vmem:[#allocation2] sm:$0xff]
          %v313 = vld [vmem:[#allocation2 + $0x8] sm:$0xff]
          %v314 = vsel %vm288, %v312, 0.0
          %315 = vadd.xlane.f32.xlu0 %v314
          %v316 = vpop.xlane.xlu0 %315
          %v317 = vsel %vm288, %v313, 0.0
          %318 = vadd.xlane.f32.xlu0 %v317
          %v319 = vpop.xlane.xlu0 %318
          %v320 = vadd.f32 %v316, 0.0
          %v321 = vadd.f32 %v319, 0.0
          %v322 = vmul.f32 %v320, 0.015625
          %v323 = vmul.f32 %v321, 0.015625
          %v324 = vsub.f32 %v312, %v322
          %v325 = vsub.f32 %v313, %v323
          %v326 = vmul.f32 %v324, %v324
          %v327 = vmul.f32 %v325, %v325
          %v328 = vsel %vm288, %v326, 0.0
          %329 = vadd.xlane.f32.xlu0 %v328
          %v330 = vpop.xlane.xlu0 %329
          %v331 = vsel %vm288, %v327, 0.0
          %332 = vadd.xlane.f32.xlu0 %v331
          %v333 = vpop.xlane.xlu0 %332
          %v334 = vadd.f32 %v330, 0.0
          %v335 = vadd.f32 %v333, 0.0
          %v336 = vmul.f32 %v334, 0.015625
          %v337 = vmul.f32 %v335, 0.015625
          %v338 = vadd.f32 %v336, 1e-05
          %v339 = vadd.f32 %v337, 1e-05
          %v340 = vrsqrt.pop %v338
          %v341 = vmul.f32 %v340, %v338
          %v342 = vmul.f32 %v341, %v340
          %v343 = vmul.f32 0.5, %v342
          %v344 = vsub.f32 1.5, %v343
          %v345 = vmul.f32 %v340, %v344
          %vm346 = vweird.f32 %v338
          %vm347 = vweird.f32 %v340
          %vm348 = vmor %vm346, %vm347
          %v349 = vsel %vm348, %v340, %v345
          %v350 = vrsqrt.pop %v339
          %v351 = vmul.f32 %v350, %v339
          %v352 = vmul.f32 %v351, %v350
          %v353 = vmul.f32 0.5, %v352
          %v354 = vsub.f32 1.5, %v353
          %v355 = vmul.f32 %v350, %v354
          %vm356 = vweird.f32 %v339
          %vm357 = vweird.f32 %v350
          %vm358 = vmor %vm356, %vm357
          %v359 = vsel %vm358, %v350, %v355
          %v360 = vmul.f32 %v324, %v349
          %v361 = vmul.f32 %v325, %v359
          %vm362 = vcmp.ge.f32.partialorder %v360, 0.0
          %vm363 = vcmp.ge.f32.partialorder %v361, 0.0
          %v364 = vmul.f32 %v360, 0.2
          %v365 = vmul.f32 %v361, 0.2
          %v366 = vsel %vm362, %v360, %v364
          %v367 = vsel %vm363, %v361, %v365
          %v368 = vpack.c.bf16 %v366, %v366
          %v369 = vpack.c.bf16 %v367, %v367
          %vm370 = vcmask 519168
          %371 = vst.msk [vmem:[%s231] sm:$0xf] %vm370, %v368
          %372 = vst.msk [vmem:[%s231 + $0x4] sm:$0xf] %vm370, %v369
        $region44: #{tpu_custom_call.1} parent=27 // pred_fallthru
          _
        %s373 = sand.u32 %s116, 1
        %s374 = scalar_lea.sflag [#allocation5], %s373
        %s375 = sand.u32 %s116, 1
        %s376 = smul.addr %s375, 8
        %s377 = scalar_lea.vmem [#allocation8], %s376
        // Predicated region
        $region45: #{tpu_custom_call.1} parent=27 // pred_check
          %p378 = pneg %p126
        $region46: #{tpu_custom_call.1} parent=27 // pred_check_branch
          %380 = sbr.rel (%p378) target = $region48
        $region47: #{tpu_custom_call.1} parent=27 // pred_region
          %s381 = smul.u32 2, %s27
          %383 = vsyncadd %s374, 0
          %s384 = smul.addr %s26, 2
          %s385 = sadd.s32 %s381, %s384
          %s386 = smul.addr %s385, 4
          %s387 = scalar_lea.hbm %s2, %s386
          %s388 = sshll.u32 %s377, 4
          %s389 = int_to_ptr.vmem [resolvable:$true] %s388
          %s390 = sshll.u32 %s387, 4
          %s391 = int_to_ptr.hbm [resolvable:$true] %s390
          %396 = dma.vmem_to_hbm [thread:$0]  %s389, 128, %s391, %s374, 64, 64, 4
        $region48: #{tpu_custom_call.1} parent=27 // pred_fallthru
          _
      $region28: #{tpu_custom_call.1} parent=5 // pred_fallthru
        _
      %p397 = scmp.le.s32.totalorder 2, %s15
      // Predicated region
      $region49: #{tpu_custom_call.1} parent=5 // pred_check
        %p398 = pneg %p397
      $region50: #{tpu_custom_call.1} parent=5 // pred_check_branch
        %400 = sbr.rel (%p398) target = $region52
      $region51: #{tpu_custom_call.1} parent=5 // pred_region
        %s401 = ssub.s32 %s15, 2
        // Predicated region
        $region53: #{tpu_custom_call.1} parent=51 // pred_check
          %p402 = pneg %p132
        $region54: #{tpu_custom_call.1} parent=51 // pred_check_branch
          %404 = sbr.rel (%p402) target = $region56
        $region55: #{tpu_custom_call.1} parent=51 // pred_region
          %s405 = sand.u32 %s117, 1
          %s406 = scalar_lea.sflag [#allocation5], %s405
          %s407 = sand.u32 %s117, 1
          %s408 = smul.addr %s407, 8
          %s409 = scalar_lea.vmem [#allocation8], %s408
          %411 = dma.done %s406, 128
        $region56: #{tpu_custom_call.1} parent=51 // pred_fallthru
          _
      $region52: #{tpu_custom_call.1} parent=5 // pred_fallthru
        _
    $region6: #{tpu_custom_call.1} parent=1 // loop_footer
      %s19 = sadd.s32 1, %s15
    $region7: #{tpu_custom_call.1} parent=1 // loop_footer_branch
      %14 = sbr.rel target = $region3
    $region8: #{tpu_custom_call.1} parent=1 // loop_exit
      _
    %412 = vsyncpa [#allocation4], 1
    %s413 = scalar_lea.sflag [#allocation4], 1
    %414 = vsyncpa %s413, 1
    %415 = vsyncpa [#allocation7], 1
    %416 = vsyncpa [#allocation5], 1
    %s417 = scalar_lea.sflag [#allocation5], 1
    %418 = vsyncpa %s417, 1

</llo_original>
